<compile_context>
chip_gen: v5e
topology: v5e:2x2
jax: 0.10.0
libtpu: 0.0.40
codegen_flags: <defaults>
</compile_context>

<pallas_src>
import functools

import jax
import jax.numpy as jnp
from jax.experimental import pallas as pl
from jax.experimental.pallas import tpu as pltpu

_HIDDEN = 50
_LANE = 128
_SUBLANE = 8
_NEG_BIG = -1e30  # plain Python float -> lowers as a literal, not a captured const


def _round_up(n, m):
    return ((n + m - 1) // m) * m


def _mlp_softmax_kernel(x_ref, w1_ref, b1_ref, w2_ref, b2_ref, o_ref, *, d_valid):
    x = x_ref[...].astype(jnp.float32)                      # (TB, Dp)
    tb, dp = x.shape

    if dp != d_valid:
        lane = jax.lax.broadcasted_iota(jnp.int32, (tb, dp), 1)
        valid = lane < d_valid
        x_sm = jnp.where(valid, x, _NEG_BIG)
    else:
        valid = None
        x_sm = x

    # softmax(x, dim=1) over the valid feature lanes
    m0 = jnp.max(x_sm, axis=1, keepdims=True)
    e0 = jnp.exp(x_sm - m0)
    obs = e0 * pl.reciprocal(jnp.sum(e0, axis=1, keepdims=True), approx=True)

    # linear1 + relu (hidden zero-padded to 128: padded columns stay exactly 0)
    h = jnp.dot(x, w1_ref[...], preferred_element_type=jnp.float32) + b1_ref[...]
    h = jnp.maximum(h, 0.0)

    # linear2 + residual softmax add
    y = jnp.dot(h, w2_ref[...], preferred_element_type=jnp.float32) + b2_ref[...]
    y = y + obs

    if valid is not None:
        y = jnp.where(valid, y, _NEG_BIG)

    # softmax(y + obs, dim=1)
    m1 = jnp.max(y, axis=1, keepdims=True)
    e1 = jnp.exp(y - m1)
    out = e1 * pl.reciprocal(jnp.sum(e1, axis=1, keepdims=True), approx=True)

    o_ref[...] = out.astype(o_ref.dtype)


def _choose_batch_tile(batch, dp):
    # double-buffered x + out tiles: 2 arrays * 2 buffers * TB * Dp * 4 B  <= 8 MiB
    tb = (8 << 20) // (4 * dp * 4)
    tb = max(_SUBLANE, min(512, tb))          # 512 cap: safe on v7x's 64 MiB VMEM
    tb = min(tb, _round_up(batch, _SUBLANE))
    return max(_SUBLANE, (tb // _SUBLANE) * _SUBLANE)


def mlp_softmax(x, w1, b1, w2, b2):
    """x: (B, num_in) f32. w1: (num_in, 50), b1: (1, 50), w2: (50, num_out), b2: (1, num_out)."""
    B, num_in = x.shape
    hidden, num_out = w2.shape
    assert w1.shape == (num_in, hidden)
    assert num_out == num_in, "residual add requires num_out == num_in"

    dp = _round_up(num_in, _LANE)     # lane-dense feature axis
    hp = _round_up(hidden, _LANE)     # lane-dense hidden axis
    tb = _choose_batch_tile(B, dp)
    bp = _round_up(B, tb)

    f32 = jnp.float32
    x_p = jnp.pad(x.astype(f32), ((0, bp - B), (0, dp - num_in)))
    w1_p = jnp.pad(w1.astype(f32), ((0, dp - num_in), (0, hp - hidden)))
    b1_p = jnp.pad(b1.astype(f32).reshape(1, -1), ((0, 0), (0, hp - hidden)))
    w2_p = jnp.pad(w2.astype(f32), ((0, hp - hidden), (0, dp - num_out)))
    b2_p = jnp.pad(b2.astype(f32).reshape(1, -1), ((0, 0), (0, dp - num_out)))

    kernel = functools.partial(_mlp_softmax_kernel, d_valid=num_in)

    cost = pl.CostEstimate(
        flops=4 * bp * dp * hp,                       # two matmuls
        transcendentals=2 * bp * dp,                  # two exps per element
        bytes_accessed=(2 * bp * dp + 2 * dp * hp + hp + dp) * 4,
    )

    out_p = pl.pallas_call(
        kernel,
        out_shape=jax.ShapeDtypeStruct((bp, dp), x.dtype),
        grid_spec=pltpu.PrefetchScalarGridSpec(
            num_scalar_prefetch=0,
            grid=(bp // tb,),
            in_specs=[
                pl.BlockSpec((tb, dp), lambda i: (i, 0)),   # x: batch-tiled
                pl.BlockSpec((dp, hp), lambda i: (0, 0)),   # w1: resident
                pl.BlockSpec((1, hp), lambda i: (0, 0)),    # b1: resident
                pl.BlockSpec((hp, dp), lambda i: (0, 0)),   # w2: resident
                pl.BlockSpec((1, dp), lambda i: (0, 0)),    # b2: resident
            ],
            out_specs=pl.BlockSpec((tb, dp), lambda i: (i, 0)),
        ),
        compiler_params=pltpu.CompilerParams(
            dimension_semantics=("parallel",),
        ),
        cost_estimate=cost,
    )(x_p, w1_p, b1_p, w2_p, b2_p)

    return out_p[:B, :num_out]


def init_params(key, num_in, num_out, hidden=_HIDDEN):
    """Deterministic PyTorch-style init: U(-1/sqrt(fan_in), +1/sqrt(fan_in))."""
    k1, k2, k3, k4 = jax.random.split(key, 4)
    s1 = 1.0 / jnp.sqrt(num_in)
    s2 = 1.0 / jnp.sqrt(hidden)
    # Stored already transposed to (in, out) for the kernel.
    w1 = jax.random.uniform(k1, (num_in, hidden), jnp.float32, -s1, s1)
    b1 = jax.random.uniform(k2, (1, hidden), jnp.float32, -s1, s1)
    w2 = jax.random.uniform(k3, (hidden, num_out), jnp.float32, -s2, s2)
    b2 = jax.random.uniform(k4, (1, num_out), jnp.float32, -s2, s2)
    return w1, b1, w2, b2


def mlp_softmax_ref(x, w1, b1, w2, b2):
    """Pure-JAX reference mirroring the PyTorch forward."""
    obs = jax.nn.softmax(x, axis=1)
    h = jnp.maximum(x @ w1 + b1, 0.0)
    y = h @ w2 + b2
    return jax.nn.softmax(y + obs, axis=1)


if __name__ == "__main__":
    num_in = num_out = 16
    batch = 8

    key = jax.random.PRNGKey(0)
    kx, kp = jax.random.split(key)
    x = jax.random.normal(kx, (batch, num_in), jnp.float32)
    w1, b1, w2, b2 = init_params(kp, num_in, num_out)

    out = mlp_softmax(x, w1, b1, w2, b2)
    out = jax.block_until_ready(out)

    ref = mlp_softmax_ref(x, w1, b1, w2, b2)
    assert out.shape == (batch, num_out)
    # approx=True reciprocals trade ~1e-4 relative error for EUP offload.
    assert jnp.allclose(out, ref, atol=3e-3, rtol=3e-3), "mismatch vs reference"
    assert jnp.allclose(jnp.sum(out, axis=1), 1.0, atol=3e-3), "rows must sum to 1"

    print("KERNEL_OK")
</pallas_src>

<mosaic_0001>
module attributes {stable_mosaic.version = 11 : i64} {
  func.func @_mlp_softmax_kernel(%arg0: i32, %arg1: memref<8x128xf32, #tpu.memory_space<vmem>>, %arg2: memref<128x128xf32, #tpu.memory_space<vmem>>, %arg3: memref<1x128xf32, #tpu.memory_space<vmem>>, %arg4: memref<128x128xf32, #tpu.memory_space<vmem>>, %arg5: memref<1x128xf32, #tpu.memory_space<vmem>>, %arg6: memref<8x128xf32, #tpu.memory_space<vmem>>) attributes {dimension_semantics = [#tpu.dimension_semantics<parallel>], iteration_bounds = array<i64: 1>, scalar_prefetch = 0 : i64, scratch_operands = 0 : i64, tpu.core_type = #tpu.core_type<tc>, window_params = [{transform_indices = @transform_0, window_bounds = array<i64: 8, 128>}, {pipeline_mode = #tpu.pipeline_mode<synchronous>, transform_indices = @transform_1, window_bounds = array<i64: 128, 128>}, {pipeline_mode = #tpu.pipeline_mode<synchronous>, transform_indices = @transform_2, window_bounds = array<i64: 1, 128>}, {pipeline_mode = #tpu.pipeline_mode<synchronous>, transform_indices = @transform_3, window_bounds = array<i64: 128, 128>}, {pipeline_mode = #tpu.pipeline_mode<synchronous>, transform_indices = @transform_4, window_bounds = array<i64: 1, 128>}, {transform_indices = @transform_5, window_bounds = array<i64: 8, 128>}]} {
    %c0 = arith.constant 0 : index
    %c0_0 = arith.constant 0 : index
    %0 = vector.load %arg1[%c0, %c0_0] : memref<8x128xf32, #tpu.memory_space<vmem>>, vector<8x128xf32>
    %1 = tpu.iota {dimensions = array<i32: 1>} : vector<8x128xi32>
    %c16_i32 = arith.constant 16 : i32
    %2 = vector.broadcast %c16_i32 : i32 to vector<8x128xi32>
    %3 = arith.cmpi slt, %1, %2 : vector<8x128xi32>
    %cst = arith.constant -1.000000e+30 : f32
    %4 = vector.broadcast %cst : f32 to vector<8x128xf32>
    %5 = arith.select %3, %0, %4 : vector<8x128xi1>, vector<8x128xf32>
    %cst_1 = arith.constant dense<0xFF800000> : vector<8xf32>
    %6 = vector.multi_reduction <maximumf>, %5, %cst_1 [1] : vector<8x128xf32> to vector<8xf32>
    %7 = vector.shape_cast %6 : vector<8xf32> to vector<8x1xf32>
    %8 = vector.broadcast %7 : vector<8x1xf32> to vector<8x128xf32>
    %9 = arith.subf %5, %8 : vector<8x128xf32>
    %10 = math.exp %9 : vector<8x128xf32>
    %cst_2 = arith.constant dense<0.000000e+00> : vector<8xf32>
    %11 = vector.multi_reduction <add>, %10, %cst_2 [1] : vector<8x128xf32> to vector<8xf32>
    %12 = vector.shape_cast %11 : vector<8xf32> to vector<8x1xf32>
    %13 = tpu.reciprocal %12 {approx = true} : vector<8x1xf32> -> vector<8x1xf32>
    %14 = vector.broadcast %13 : vector<8x1xf32> to vector<8x128xf32>
    %15 = arith.mulf %10, %14 : vector<8x128xf32>
    %c0_3 = arith.constant 0 : index
    %c0_4 = arith.constant 0 : index
    %16 = vector.load %arg2[%c0_3, %c0_4] : memref<128x128xf32, #tpu.memory_space<vmem>>, vector<128x128xf32>
    %cst_5 = arith.constant dense<0.000000e+00> : vector<8x128xf32>
    %17 = tpu.matmul %0, %16, %cst_5 {dimension_numbers = #tpu.dot_dimension_numbers<[1], [0], [0], [1], [0, 0, 1, 1], [], []>} : vector<8x128xf32>, vector<128x128xf32>, vector<8x128xf32> -> vector<8x128xf32>
    %c0_6 = arith.constant 0 : index
    %c0_7 = arith.constant 0 : index
    %18 = vector.load %arg3[%c0_6, %c0_7] : memref<1x128xf32, #tpu.memory_space<vmem>>, vector<1x128xf32>
    %19 = vector.broadcast %18 : vector<1x128xf32> to vector<8x128xf32>
    %20 = arith.addf %17, %19 : vector<8x128xf32>
    %cst_8 = arith.constant 0.000000e+00 : f32
    %21 = vector.broadcast %cst_8 : f32 to vector<8x128xf32>
    %22 = arith.maximumf %20, %21 : vector<8x128xf32>
    %c0_9 = arith.constant 0 : index
    %c0_10 = arith.constant 0 : index
    %23 = vector.load %arg4[%c0_9, %c0_10] : memref<128x128xf32, #tpu.memory_space<vmem>>, vector<128x128xf32>
    %cst_11 = arith.constant dense<0.000000e+00> : vector<8x128xf32>
    %24 = tpu.matmul %22, %23, %cst_11 {dimension_numbers = #tpu.dot_dimension_numbers<[1], [0], [0], [1], [0, 0, 1, 1], [], []>} : vector<8x128xf32>, vector<128x128xf32>, vector<8x128xf32> -> vector<8x128xf32>
    %c0_12 = arith.constant 0 : index
    %c0_13 = arith.constant 0 : index
    %25 = vector.load %arg5[%c0_12, %c0_13] : memref<1x128xf32, #tpu.memory_space<vmem>>, vector<1x128xf32>
    %26 = vector.broadcast %25 : vector<1x128xf32> to vector<8x128xf32>
    %27 = arith.addf %24, %26 : vector<8x128xf32>
    %28 = arith.addf %27, %15 : vector<8x128xf32>
    %cst_14 = arith.constant -1.000000e+30 : f32
    %29 = vector.broadcast %cst_14 : f32 to vector<8x128xf32>
    %30 = arith.select %3, %28, %29 : vector<8x128xi1>, vector<8x128xf32>
    %cst_15 = arith.constant dense<0xFF800000> : vector<8xf32>
    %31 = vector.multi_reduction <maximumf>, %30, %cst_15 [1] : vector<8x128xf32> to vector<8xf32>
    %32 = vector.shape_cast %31 : vector<8xf32> to vector<8x1xf32>
    %33 = vector.broadcast %32 : vector<8x1xf32> to vector<8x128xf32>
    %34 = arith.subf %30, %33 : vector<8x128xf32>
    %35 = math.exp %34 : vector<8x128xf32>
    %cst_16 = arith.constant dense<0.000000e+00> : vector<8xf32>
    %36 = vector.multi_reduction <add>, %35, %cst_16 [1] : vector<8x128xf32> to vector<8xf32>
    %37 = vector.shape_cast %36 : vector<8xf32> to vector<8x1xf32>
    %38 = tpu.reciprocal %37 {approx = true} : vector<8x1xf32> -> vector<8x1xf32>
    %39 = vector.broadcast %38 : vector<8x1xf32> to vector<8x128xf32>
    %40 = arith.mulf %35, %39 : vector<8x128xf32>
    %c0_17 = arith.constant 0 : index
    %c0_18 = arith.constant 0 : index
    %41 = vector.load %arg6[%c0_17, %c0_18] : memref<8x128xf32, #tpu.memory_space<vmem>>, vector<8x128xf32>
    tpu.vector_store %arg6[%c0_17, %c0_18], %40 {strides = array<i32>} : memref<8x128xf32, #tpu.memory_space<vmem>>, vector<8x128xf32>,
    return
  }
  func.func @transform_0(%arg0: i32) -> (i32, i32) {
    %c0_i32 = arith.constant 0 : i32
    %c0_i32_0 = arith.constant 0 : i32
    return %arg0, %c0_i32 : i32, i32
  }
  func.func @transform_1(%arg0: i32) -> (i32, i32) {
    %c0_i32 = arith.constant 0 : i32
    %c0_i32_0 = arith.constant 0 : i32
    %c0_i32_1 = arith.constant 0 : i32
    return %c0_i32, %c0_i32_0 : i32, i32
  }
  func.func @transform_2(%arg0: i32) -> (i32, i32) {
    %c0_i32 = arith.constant 0 : i32
    %c0_i32_0 = arith.constant 0 : i32
    %c0_i32_1 = arith.constant 0 : i32
    return %c0_i32, %c0_i32_0 : i32, i32
  }
  func.func @transform_3(%arg0: i32) -> (i32, i32) {
    %c0_i32 = arith.constant 0 : i32
    %c0_i32_0 = arith.constant 0 : i32
    %c0_i32_1 = arith.constant 0 : i32
    return %c0_i32, %c0_i32_0 : i32, i32
  }
  func.func @transform_4(%arg0: i32) -> (i32, i32) {
    %c0_i32 = arith.constant 0 : i32
    %c0_i32_0 = arith.constant 0 : i32
    %c0_i32_1 = arith.constant 0 : i32
    return %c0_i32, %c0_i32_0 : i32, i32
  }
  func.func @transform_5(%arg0: i32) -> (i32, i32) {
    %c0_i32 = arith.constant 0 : i32
    %c0_i32_0 = arith.constant 0 : i32
    return %arg0, %c0_i32 : i32, i32
  }
}

</mosaic_0001>

<llo_original>
// kernel: tpu_custom_call.1
$region0: #{tpu_custom_call.1}
  #allocation0 [shape = 'u32[]', space=smem, size = 0x4, offset = 0x4, fixed_abs, tag = 'smem constant byte address 0x4 - core index']
  #allocation1 [shape = 'u32[72,128]{1,0:T(1,128)}', space=vmem, size = 0x9000, scoped, tag = 'internal scratch']
  %s0 = inlined_call_operand.hbm [shape: f32[8,128], index: 0, kind: input, shape index: {}]
  %s1 = inlined_call_operand.hbm [shape: f32[128,128], index: 1, kind: input, shape index: {}]
  %s2 = inlined_call_operand.vmem [shape: f32[1,128], index: 2, kind: input, shape index: {}]
  %s3 = inlined_call_operand.hbm [shape: f32[128,128], index: 3, kind: input, shape index: {}]
  %s4 = inlined_call_operand.vmem [shape: f32[1,128], index: 4, kind: input, shape index: {}]
  %s5 = inlined_call_operand.hbm [shape: f32[8,128], index: 5, kind: output, shape index: {}]
  %s6 = sld [smem:[#allocation0]]
  $region42: #{tpu_custom_call.1} parent=0
    _
  %s8 = ssub.s32 1, %s6
  %s9 = scalar_select 0, %s8, %s6
  $region1: #{tpu_custom_call.1} parent=0
    #allocation2 [shape = 'u8[4096]{0}', space=vmem, size = 0x1000, scoped, tag = 'input window, operand 0, single buffered']
    #allocation3 [shape = 's32[1]{0}', space=sflag, size = 0x4, scoped, tag = 'scoped memory for tpu_custom_call.1']
    #allocation4 [shape = 's32[1]{0}', space=sflag, size = 0x4, scoped, tag = 'scoped memory for tpu_custom_call.1']
    #allocation5 [shape = 'u8[65536]{0}', space=vmem, size = 0x10000, scoped, tag = 'input window, operand 1, single buffered']
    #allocation6 [shape = 's32[1]{0}', space=sflag, size = 0x4, scoped, tag = 'scoped memory for tpu_custom_call.1']
    #allocation7 [shape = 'u8[65536]{0}', space=vmem, size = 0x10000, scoped, tag = 'input window, operand 3, single buffered']
    #allocation8 [shape = 'u8[4096]{0}', space=vmem, size = 0x1000, scoped, tag = 'output window, operand 0, single buffered']
    %10 = vsyncpa [#allocation3], 0
    %11 = vsyncpa [#allocation6], 0
    %12 = vsyncpa [#allocation4], 0
    // Predicated region
    $region2: #{tpu_custom_call.1} parent=1 // pred_check
      _
    $region3: #{tpu_custom_call.1} parent=1 // pred_check_branch
      %14 = sbr.rel (0) target = $region5
    $region4: #{tpu_custom_call.1} parent=1 // pred_region
      %16 = vsyncadd [#allocation3], 0
      %s18 = sshll.u32 %s0, 4
      %s19 = int_to_ptr.hbm [resolvable:$true] %s18
      %s20 = sshll.u32 [#allocation2], 4
      %s21 = int_to_ptr.vmem [resolvable:$true] %s20
      %23 = dma.hbm_to_vmem [thread:$0]  %s19, 128, %s21, [#allocation3]
    $region5: #{tpu_custom_call.1} parent=1 // pred_fallthru
      _
    // Predicated region
    $region6: #{tpu_custom_call.1} parent=1 // pred_check
      _
    $region7: #{tpu_custom_call.1} parent=1 // pred_check_branch
      %25 = sbr.rel (0) target = $region9
    $region8: #{tpu_custom_call.1} parent=1 // pred_region
      %27 = vsyncadd [#allocation6], 0
      %s28 = sshll.u32 %s1, 4
      %s29 = int_to_ptr.hbm [resolvable:$true] %s28
      %s30 = sshll.u32 [#allocation5], 4
      %s31 = int_to_ptr.vmem [resolvable:$true] %s30
      %36 = dma.hbm_to_vmem [thread:$0]  %s29, 2048, %s31, [#allocation6], 128, 128, 8
    $region9: #{tpu_custom_call.1} parent=1 // pred_fallthru
      _
    // Predicated region
    $region10: #{tpu_custom_call.1} parent=1 // pred_check
      _
    $region11: #{tpu_custom_call.1} parent=1 // pred_check_branch
      %38 = sbr.rel (0) target = $region13
    $region12: #{tpu_custom_call.1} parent=1 // pred_region
      _
    $region13: #{tpu_custom_call.1} parent=1 // pred_fallthru
      _
    // Predicated region
    $region14: #{tpu_custom_call.1} parent=1 // pred_check
      _
    $region15: #{tpu_custom_call.1} parent=1 // pred_check_branch
      %40 = sbr.rel (0) target = $region17
    $region16: #{tpu_custom_call.1} parent=1 // pred_region
      %42 = vsyncadd [#allocation6], 0
      %s43 = sshll.u32 %s3, 4
      %s44 = int_to_ptr.hbm [resolvable:$true] %s43
      %s45 = sshll.u32 [#allocation7], 4
      %s46 = int_to_ptr.vmem [resolvable:$true] %s45
      %51 = dma.hbm_to_vmem [thread:$0]  %s44, 2048, %s46, [#allocation6], 128, 128, 8
    $region17: #{tpu_custom_call.1} parent=1 // pred_fallthru
      _
    // Predicated region
    $region18: #{tpu_custom_call.1} parent=1 // pred_check
      _
    $region19: #{tpu_custom_call.1} parent=1 // pred_check_branch
      %53 = sbr.rel (0) target = $region21
    $region20: #{tpu_custom_call.1} parent=1 // pred_region
      _
    $region21: #{tpu_custom_call.1} parent=1 // pred_fallthru
      _
    // Predicated region
    $region22: #{tpu_custom_call.1} parent=1 // pred_check
      _
    $region23: #{tpu_custom_call.1} parent=1 // pred_check_branch
      %55 = sbr.rel (0) target = $region25
    $region24: #{tpu_custom_call.1} parent=1 // pred_region
      %57 = dma.done [#allocation3], 128
    $region25: #{tpu_custom_call.1} parent=1 // pred_fallthru
      _
    // Predicated region
    $region26: #{tpu_custom_call.1} parent=1 // pred_check
      _
    $region27: #{tpu_custom_call.1} parent=1 // pred_check_branch
      %59 = sbr.rel (0) target = $region29
    $region28: #{tpu_custom_call.1} parent=1 // pred_region
      %61 = dma.done [#allocation6], 2048
    $region29: #{tpu_custom_call.1} parent=1 // pred_fallthru
      _
    // Predicated region
    $region30: #{tpu_custom_call.1} parent=1 // pred_check
      _
    $region31: #{tpu_custom_call.1} parent=1 // pred_check_branch
      %63 = sbr.rel (0) target = $region33
    $region32: #{tpu_custom_call.1} parent=1 // pred_region
      %65 = dma.done [#allocation6], 2048
    $region33: #{tpu_custom_call.1} parent=1 // pred_fallthru
      _
    %v66 = vld [vmem:[#allocation2] sm:$0xff]
    %v67 = vlaneseq
    %v68 = vand.u32 %v67, 127
    %vm69 = vcmp.lt.s32.totalorder %v68, 16
    %v70 = vsel %vm69, %v66, -1e+30
    %71 = vmax.xlane.f32.xlu0 %v70
    %v72 = vpop.xlane.xlu0 %71
    %v73 = vsub.f32 %v70, %v72
    %v74 = vmul.f32 %v73, 1.442695
    %v75 = vpow.pop %v74
    %76 = vadd.xlane.f32.xlu0 %v75
    %v77 = vpop.xlane.xlu0 %76
    %v78 = vrcp.pop %v77
    %v79 = vmul.f32 %v75, %v78
    %v80 = vld [vmem:[#allocation5] sm:$0xff]
    %v81 = vld [vmem:[#allocation5 + $0x8] sm:$0xff]
    %v82 = vld [vmem:[#allocation5 + $0x10] sm:$0xff]
    %v83 = vld [vmem:[#allocation5 + $0x18] sm:$0xff]
    %v84 = vld [vmem:[#allocation5 + $0x20] sm:$0xff]
    %v85 = vld [vmem:[#allocation5 + $0x28] sm:$0xff]
    %v86 = vld [vmem:[#allocation5 + $0x30] sm:$0xff]
    %v87 = vld [vmem:[#allocation5 + $0x38] sm:$0xff]
    %v88 = vld [vmem:[#allocation5 + $0x40] sm:$0xff]
    %v89 = vld [vmem:[#allocation5 + $0x48] sm:$0xff]
    %v90 = vld [vmem:[#allocation5 + $0x50] sm:$0xff]
    %v91 = vld [vmem:[#allocation5 + $0x58] sm:$0xff]
    %v92 = vld [vmem:[#allocation5 + $0x60] sm:$0xff]
    %v93 = vld [vmem:[#allocation5 + $0x68] sm:$0xff]
    %v94 = vld [vmem:[#allocation5 + $0x70] sm:$0xff]
    %v95 = vld [vmem:[#allocation5 + $0x78] sm:$0xff]
    %v96 = vld [vmem:[%s2] sm:$0x1]
    %v98 = vperm.slane %v96, 0
    %100 = vmatpush.msra.mxu0 %v95
    %101 = vmatpush.msra.mxu0 %v94
    %102 = vmatpush.msra.mxu0 %v93
    %103 = vmatpush.msra.mxu0 %v92
    %104 = vmatpush.msra.mxu0 %v91
    %105 = vmatpush.msra.mxu0 %v90
    %106 = vmatpush.msra.mxu0 %v89
    %107 = vmatpush.msra.mxu0 %v88
    %108 = vmatpush.msra.mxu0 %v87
    %109 = vmatpush.msra.mxu0 %v86
    %110 = vmatpush.msra.mxu0 %v85
    %111 = vmatpush.msra.mxu0 %v84
    %112 = vmatpush.msra.mxu0 %v83
    %113 = vmatpush.msra.mxu0 %v82
    %114 = vmatpush.msra.mxu0 %v81
    %115 = vmatpush.msra.mxu0 %v80
    %116 = vmatmul.f32.gmra.mxu0 %v66
    %v117 = vpop.f32.mrf.mxu0
    %v118 = vadd.f32 %v98, %v117
    %119 = vdwg.mxu0
    %v120 = vmax.f32 %v118, 0.0
    %v121 = vld [vmem:[#allocation7] sm:$0xff]
    %v122 = vld [vmem:[#allocation7 + $0x8] sm:$0xff]
    %v123 = vld [vmem:[#allocation7 + $0x10] sm:$0xff]
    %v124 = vld [vmem:[#allocation7 + $0x18] sm:$0xff]
    %v125 = vld [vmem:[#allocation7 + $0x20] sm:$0xff]
    %v126 = vld [vmem:[#allocation7 + $0x28] sm:$0xff]
    %v127 = vld [vmem:[#allocation7 + $0x30] sm:$0xff]
    %v128 = vld [vmem:[#allocation7 + $0x38] sm:$0xff]
    %v129 = vld [vmem:[#allocation7 + $0x40] sm:$0xff]
    %v130 = vld [vmem:[#allocation7 + $0x48] sm:$0xff]
    %v131 = vld [vmem:[#allocation7 + $0x50] sm:$0xff]
    %v132 = vld [vmem:[#allocation7 + $0x58] sm:$0xff]
    %v133 = vld [vmem:[#allocation7 + $0x60] sm:$0xff]
    %v134 = vld [vmem:[#allocation7 + $0x68] sm:$0xff]
    %v135 = vld [vmem:[#allocation7 + $0x70] sm:$0xff]
    %v136 = vld [vmem:[#allocation7 + $0x78] sm:$0xff]
    %v137 = vld [vmem:[%s4] sm:$0x1]
    %v139 = vperm.slane %v137, 0
    %141 = vmatpush.msra.mxu0 %v136
    %142 = vmatpush.msra.mxu0 %v135
    %143 = vmatpush.msra.mxu0 %v134
    %144 = vmatpush.msra.mxu0 %v133
    %145 = vmatpush.msra.mxu0 %v132
    %146 = vmatpush.msra.mxu0 %v131
    %147 = vmatpush.msra.mxu0 %v130
    %148 = vmatpush.msra.mxu0 %v129
    %149 = vmatpush.msra.mxu0 %v128
    %150 = vmatpush.msra.mxu0 %v127
    %151 = vmatpush.msra.mxu0 %v126
    %152 = vmatpush.msra.mxu0 %v125
    %153 = vmatpush.msra.mxu0 %v124
    %154 = vmatpush.msra.mxu0 %v123
    %155 = vmatpush.msra.mxu0 %v122
    %156 = vmatpush.msra.mxu0 %v121
    %157 = vmatmul.f32.gmra.mxu0 %v120
    %v158 = vpop.f32.mrf.mxu0
    %v159 = vadd.f32 %v139, %v158
    %160 = vdwg.mxu0
    %v161 = vadd.f32 %v159, %v79
    %v162 = vsel %vm69, %v161, -1e+30
    %163 = vmax.xlane.f32.xlu0 %v162
    %v164 = vpop.xlane.xlu0 %163
    %v165 = vsub.f32 %v162, %v164
    %v166 = vmul.f32 %v165, 1.442695
    %v167 = vpow.pop %v166
    %168 = vadd.xlane.f32.xlu0 %v167
    %v169 = vpop.xlane.xlu0 %168
    %v170 = vrcp.pop %v169
    %v171 = vmul.f32 %v167, %v170
    %172 = vst [vmem:[#allocation8] sm:$0xff] %v171
    // Predicated region
    $region34: #{tpu_custom_call.1} parent=1 // pred_check
      _
    $region35: #{tpu_custom_call.1} parent=1 // pred_check_branch
      %174 = sbr.rel (0) target = $region37
    $region36: #{tpu_custom_call.1} parent=1 // pred_region
      %176 = vsyncadd [#allocation4], 0
      %s178 = sshll.u32 [#allocation8], 4
      %s179 = int_to_ptr.vmem [resolvable:$true] %s178
      %s180 = sshll.u32 %s5, 4
      %s181 = int_to_ptr.hbm [resolvable:$true] %s180
      %183 = dma.vmem_to_hbm [thread:$0]  %s179, 128, %s181, [#allocation4]
    $region37: #{tpu_custom_call.1} parent=1 // pred_fallthru
      _
    // Predicated region
    $region38: #{tpu_custom_call.1} parent=1 // pred_check
      _
    $region39: #{tpu_custom_call.1} parent=1 // pred_check_branch
      %185 = sbr.rel (0) target = $region41
    $region40: #{tpu_custom_call.1} parent=1 // pred_region
      %187 = dma.done [#allocation4], 128
    $region41: #{tpu_custom_call.1} parent=1 // pred_fallthru
      _
    %188 = vsyncpa [#allocation3], 1
    %189 = vsyncpa [#allocation6], 1
    %190 = vsyncpa [#allocation4], 1

</llo_original>
